<compile_context>
chip_gen: v7x
topology: tpu7x:2x2x1
jax: 0.10.0
libtpu: 0.0.40
codegen_flags: <defaults>
</compile_context>

<pallas_src>
import functools

import jax
import jax.numpy as jnp
from jax.experimental import pallas as pl
from jax.experimental.pallas import tpu as pltpu

LANES = 128


# ---------------------------------------------------------------------------
# Pallas kernel: per-position loss contributions + masked accumulation
# ---------------------------------------------------------------------------
def _yolo_loss_kernel(pred_ref, tgt_ref, anc_ref, out_ref, *,
                      n_valid, n_cls, j_half, ts):
    p = pl.program_id(0)
    a = pl.program_id(1)
    j = pl.program_id(2)

    # Anchor scalars (and host-precomputed reciprocals) from SMEM.
    aw = anc_ref[a, 0]
    ah = anc_ref[a, 1]
    inv_aw = anc_ref[a, 2]
    inv_ah = anc_ref[a, 3]

    # Per-channel dense (ts, 128) slabs (channel axis is the un-tiled leading
    # dim, so every slice below is full (8,128)-tile aligned).
    obj_logit = pred_ref[0]
    px = pred_ref[1]
    py = pred_ref[2]
    pw = pred_ref[3]
    ph = pred_ref[4]

    t_obj = tgt_ref[0]
    tx = tgt_ref[1]
    ty = tgt_ref[2]
    tw = tgt_ref[3]
    th = tgt_ref[4]
    t_cls = tgt_ref[5]

    # Tail-validity mask computed in-kernel (no `valid` HBM stream).
    rows = jax.lax.broadcasted_iota(jnp.int32, (ts, LANES), 0)
    lanes = jax.lax.broadcasted_iota(jnp.int32, (ts, LANES), 1)
    blk = ts * LANES
    pos = (p * j_half + j) * blk + rows * LANES + lanes
    valid = pos < n_valid

    obj_m = jnp.logical_and(t_obj == 1.0, valid)
    noobj_m = jnp.logical_and(t_obj == 0.0, valid)

    # --- no-object loss: BCEWithLogits(obj_logit, t_obj), and sigmoid(obj) --
    # Share e = exp(-|x|) between the BCE softplus term and the sigmoid.
    # (log(1 + e) with e in (0, 1] has no cancellation; abs error vs log1p is
    #  < 1e-7, negligible for a summed loss term.)
    x = obj_logit
    e = jnp.exp(-jnp.abs(x))
    bce = jnp.maximum(x, 0.0) - x * t_obj + jnp.log(1.0 + e)
    s_obj = jnp.where(x >= 0.0, 1.0, e) / (1.0 + e)      # == sigmoid(x)

    # --- decode boxes: [sigmoid(xy), exp(wh) * anchors] and IoU vs target ---
    sx = jax.nn.sigmoid(px)
    sy = jax.nn.sigmoid(py)
    bw = jnp.exp(pw) * aw
    bh = jnp.exp(ph) * ah

    b1x1 = sx - bw * 0.5
    b1y1 = sy - bh * 0.5
    b1x2 = sx + bw * 0.5
    b1y2 = sy + bh * 0.5
    b2x1 = tx - tw * 0.5
    b2y1 = ty - th * 0.5
    b2x2 = tx + tw * 0.5
    b2y2 = ty + th * 0.5
    inter = (jnp.maximum(jnp.minimum(b1x2, b2x2) - jnp.maximum(b1x1, b2x1), 0.0)
             * jnp.maximum(jnp.minimum(b1y2, b2y2) - jnp.maximum(b1y1, b2y1), 0.0))
    a1 = jnp.abs((b1x2 - b1x1) * (b1y2 - b1y1))
    a2 = jnp.abs((b2x2 - b2x1) * (b2y2 - b2y1))
    union = a1 + a2 - inter + 1e-6
    # EUP approx reciprocal + one Newton step (2 cheap VALU ops) -> f32 exact.
    r = pl.reciprocal(union, approx=True)
    r = r * (2.0 - union * r)
    ious = inter * r

    # --- object loss: MSE(sigmoid(obj_logit), iou * t_obj) on obj mask ------
    obj_mse = (s_obj - ious * t_obj) ** 2

    # --- box loss: pred xy -> sigmoid, target wh -> log(1e-6 + t / anchor) --
    twl = jnp.log(1e-6 + tw * inv_aw)
    thl = jnp.log(1e-6 + th * inv_ah)
    box_se = (sx - tx) ** 2 + (sy - ty) ** 2 + (pw - twl) ** 2 + (ph - thl) ** 2

    # --- class loss: cross-entropy(class_logits, class_idx), C small/static -
    mx = pred_ref[5]
    for c in range(1, n_cls):
        mx = jnp.maximum(mx, pred_ref[5 + c])
    se = jnp.zeros_like(mx)
    picked = jnp.zeros_like(mx)
    for c in range(n_cls):
        lc = pred_ref[5 + c]
        se = se + jnp.exp(lc - mx)
        picked = picked + jnp.where(t_cls == float(c), lc, 0.0)
    ce = mx + jnp.log(se) - picked

    # --- accumulate into the resident output block (P3 pattern) -------------
    # Each row of out_ref is a full (ts,128) tile-aligned slab, so these are
    # unmasked full-width vreg stores (no masked sub-vreg RMWs).
    @pl.when(j == 0)
    def _():
        out_ref[...] = jnp.zeros_like(out_ref)

    zero = jnp.zeros_like(bce)
    out_ref[0] += jnp.where(noobj_m, bce, zero)       # sum no-obj BCE
    out_ref[1] += jnp.where(noobj_m, 1.0, zero)       # count no-obj
    out_ref[2] += jnp.where(obj_m, obj_mse, zero)     # sum obj MSE
    out_ref[3] += jnp.where(obj_m, 1.0, zero)         # count obj
    out_ref[4] += jnp.where(obj_m, box_se, zero)      # sum box SE (4 coords)
    out_ref[5] += jnp.where(obj_m, ce, zero)          # sum class CE


# ---------------------------------------------------------------------------
# Tiling heuristic: pick (TS rows per block, P core split, Jh steps per half)
# ---------------------------------------------------------------------------
def _pick_tiling(n_rows, n_pred_ch):
    # VMEM budget: 2x double-buffered pred + 2x tgt + resident out block.
    budget = 12 * 1024 * 1024            # safe under the 16 MiB v5e default
    overhead_rows = 32                   # per-grid-step fixed cost, in "rows"
    best = None
    for ts in (256, 128, 64, 32, 16, 8):
        foot = (2 * (n_pred_ch + 6) + 6) * ts * LANES * 4
        if foot > budget:
            continue
        blocks = -(-n_rows // ts)
        cost = blocks * (ts + overhead_rows)   # padded rows + step overhead
        if best is None or cost < best[1]:
            best = (ts, cost, blocks)
    ts, _, blocks = best
    # Split the position axis across 2 cores (v7x) only when it is free
    # (no extra padded block); on v5e/v6e "parallel" is a no-op anyway.
    p = 2 if (blocks >= 2 and blocks % 2 == 0) else 1
    jh = blocks // p
    return ts, p, jh


# ---------------------------------------------------------------------------
# Wrapper: layout plumbing + final scalar combination
# ---------------------------------------------------------------------------
@jax.jit
def yolo_loss_pallas(pred, target, anchors):
    B, A, S, S2, D = pred.shape
    C = D - 5
    M = B * S * S2                         # positions per anchor
    R0 = -(-M // LANES)                    # rows of 128 lanes actually needed
    TS, P, Jh = _pick_tiling(R0, D)
    R = P * Jh * TS                        # padded rows per anchor
    Mp = R * LANES

    # Channel-major layout: (A, channels, rows_of_128, 128).  transpose + pad
    # + cast fuse into a single XLA pass under jit (layout plumbing only).
    pred_t = jnp.transpose(pred.astype(jnp.float32), (1, 4, 0, 2, 3)).reshape(A, D, M)
    tgt_t = jnp.transpose(target.astype(jnp.float32), (1, 4, 0, 2, 3)).reshape(A, 6, M)
    pred_t = jnp.pad(pred_t, ((0, 0), (0, 0), (0, Mp - M))).reshape(A, D, R, LANES)
    tgt_t = jnp.pad(tgt_t, ((0, 0), (0, 0), (0, Mp - M))).reshape(A, 6, R, LANES)

    anc = anchors.astype(jnp.float32)                      # (A, 2)
    anc_tbl = jnp.concatenate([anc, 1.0 / anc], axis=1)    # (A, 4) -> SMEM

    kernel = functools.partial(_yolo_loss_kernel,
                               n_valid=M, n_cls=C, j_half=Jh, ts=TS)

    out = pl.pallas_call(
        kernel,
        out_shape=jax.ShapeDtypeStruct((P, A, 6, TS, LANES), jnp.float32),
        grid_spec=pltpu.PrefetchScalarGridSpec(
            num_scalar_prefetch=0,
            grid=(P, A, Jh),
            in_specs=[
                pl.BlockSpec((None, D, TS, LANES),
                             lambda p, a, j: (a, 0, p * Jh + j, 0)),
                pl.BlockSpec((None, 6, TS, LANES),
                             lambda p, a, j: (a, 0, p * Jh + j, 0)),
                pl.BlockSpec(memory_space=pltpu.SMEM),
            ],
            out_specs=pl.BlockSpec((None, None, 6, TS, LANES),
                                   lambda p, a, j: (p, a, 0, 0, 0)),
        ),
        compiler_params=pltpu.CompilerParams(
            dimension_semantics=("parallel", "parallel", "arbitrary")),
    )(pred_t, tgt_t, anc_tbl)

    sums = jnp.sum(out, axis=(0, 1, 3, 4))   # (6,) partial slabs -> totals
    cnt_noobj = sums[1]
    cnt_obj = sums[3]
    no_object_loss = sums[0] / cnt_noobj
    object_loss = sums[2] / cnt_obj
    box_loss = sums[4] / (4.0 * cnt_obj)     # MSE mean over n_obj * 4
    class_loss = sums[5] / cnt_obj
    return box_loss + object_loss + no_object_loss + class_loss


# ---------------------------------------------------------------------------
# Pure-JAX reference (mirrors the PyTorch forward, for verification)
# ---------------------------------------------------------------------------
def yolo_loss_ref(pred, target, anchors):
    pred = pred.astype(jnp.float32)
    target = target.astype(jnp.float32)
    obj = target[..., 0] == 1.0
    noobj = target[..., 0] == 0.0

    x = pred[..., 0]
    y = target[..., 0]
    bce = jnp.maximum(x, 0.0) - x * y + jnp.log1p(jnp.exp(-jnp.abs(x)))
    no_object_loss = jnp.sum(jnp.where(noobj, bce, 0.0)) / jnp.sum(noobj)

    anc = anchors.reshape(1, 3, 1, 1, 2)
    box_preds = jnp.concatenate(
        [jax.nn.sigmoid(pred[..., 1:3]), jnp.exp(pred[..., 3:5]) * anc], axis=-1)

    b1 = box_preds
    b2 = target[..., 1:5]
    b1x1, b1y1 = b1[..., 0] - b1[..., 2] / 2, b1[..., 1] - b1[..., 3] / 2
    b1x2, b1y2 = b1[..., 0] + b1[..., 2] / 2, b1[..., 1] + b1[..., 3] / 2
    b2x1, b2y1 = b2[..., 0] - b2[..., 2] / 2, b2[..., 1] - b2[..., 3] / 2
    b2x2, b2y2 = b2[..., 0] + b2[..., 2] / 2, b2[..., 1] + b2[..., 3] / 2
    inter = (jnp.clip(jnp.minimum(b1x2, b2x2) - jnp.maximum(b1x1, b2x1), 0)
             * jnp.clip(jnp.minimum(b1y2, b2y2) - jnp.maximum(b1y1, b2y1), 0))
    a1 = jnp.abs((b1x2 - b1x1) * (b1y2 - b1y1))
    a2 = jnp.abs((b2x2 - b2x1) * (b2y2 - b2y1))
    ious = inter / (a1 + a2 - inter + 1e-6)

    obj_mse = (jax.nn.sigmoid(pred[..., 0]) - ious * target[..., 0]) ** 2
    object_loss = jnp.sum(jnp.where(obj, obj_mse, 0.0)) / jnp.sum(obj)

    sxy = jax.nn.sigmoid(pred[..., 1:3])
    twh = jnp.log(1e-6 + target[..., 3:5] / anc)
    p_box = jnp.concatenate([sxy, pred[..., 3:5]], axis=-1)
    t_box = jnp.concatenate([target[..., 1:3], twh], axis=-1)
    box_se = jnp.sum((p_box - t_box) ** 2, axis=-1)
    box_loss = jnp.sum(jnp.where(obj, box_se, 0.0)) / (4.0 * jnp.sum(obj))

    logits = pred[..., 5:]
    lse = jax.nn.logsumexp(logits, axis=-1)
    cls = target[..., 5].astype(jnp.int32)
    picked = jnp.take_along_axis(logits, cls[..., None], axis=-1)[..., 0]
    class_loss = jnp.sum(jnp.where(obj, lse - picked, 0.0)) / jnp.sum(obj)

    return box_loss + object_loss + no_object_loss + class_loss


if __name__ == "__main__":
    B, A, S, C = 2, 3, 8, 4   # batch, anchors-per-scale, grid size, classes
    D = 5 + C

    key = jax.random.PRNGKey(0)
    k1, k2, k3, k4, k5 = jax.random.split(key, 5)

    pred = jax.random.normal(k1, (B, A, S, S, D), dtype=jnp.float32)

    t_obj = jax.random.bernoulli(k2, 0.3, (B, A, S, S)).astype(jnp.float32)
    # guarantee both obj and no-obj cells exist
    t_obj = t_obj.at[0, 0, 0, 0].set(1.0).at[0, 0, 0, 1].set(0.0)
    t_xy = jax.random.uniform(k3, (B, A, S, S, 2), minval=0.05, maxval=0.95)
    t_wh = jax.random.uniform(k4, (B, A, S, S, 2), minval=0.2, maxval=3.0)
    t_cls = jax.random.randint(k5, (B, A, S, S, 1), 0, C).astype(jnp.float32)
    target = jnp.concatenate([t_obj[..., None], t_xy, t_wh, t_cls], axis=-1)

    anchors = jnp.array([[0.5, 0.7], [1.0, 1.3], [2.0, 1.8]], dtype=jnp.float32)

    loss_kernel = jax.block_until_ready(yolo_loss_pallas(pred, target, anchors))
    loss_ref = jax.block_until_ready(yolo_loss_ref(pred, target, anchors))

    if not jnp.allclose(loss_kernel, loss_ref, rtol=2e-3, atol=2e-3):
        raise AssertionError(f"mismatch: kernel={loss_kernel} ref={loss_ref}")

    print("KERNEL_OK")
</pallas_src>

<mosaic_0001>
module attributes {stable_mosaic.version = 11 : i64} {
  func.func @_yolo_loss_kernel(%arg0: i32, %arg1: i32, %arg2: i32, %arg3: memref<1x9x8x128xf32, #tpu.memory_space<vmem>>, %arg4: memref<1x6x8x128xf32, #tpu.memory_space<vmem>>, %arg5: memref<3x4xf32, #tpu.memory_space<smem>>, %arg6: memref<1x1x6x8x128xf32, #tpu.memory_space<vmem>>) attributes {dimension_semantics = [#tpu.dimension_semantics<parallel>, #tpu.dimension_semantics<parallel>, #tpu.dimension_semantics<arbitrary>], iteration_bounds = array<i64: 1, 3, 1>, scalar_prefetch = 0 : i64, scratch_operands = 0 : i64, tpu.core_type = #tpu.core_type<tc>, window_params = [{transform_indices = @transform_0, window_bounds = array<i64: 1, 9, 8, 128>}, {transform_indices = @transform_1, window_bounds = array<i64: 1, 6, 8, 128>}, {transform_indices = @transform_2, window_bounds = array<i64: 3, 4>}, {transform_indices = @transform_3, window_bounds = array<i64: 1, 1, 6, 8, 128>}]} {
    %0 = arith.index_cast %arg1 : i32 to index
    %c0 = arith.constant 0 : index
    %1 = memref.load %arg5[%0, %c0] : memref<3x4xf32, #tpu.memory_space<smem>>
    %2 = arith.index_cast %arg1 : i32 to index
    %c1 = arith.constant 1 : index
    %3 = memref.load %arg5[%2, %c1] : memref<3x4xf32, #tpu.memory_space<smem>>
    %4 = arith.index_cast %arg1 : i32 to index
    %c2 = arith.constant 2 : index
    %5 = memref.load %arg5[%4, %c2] : memref<3x4xf32, #tpu.memory_space<smem>>
    %6 = arith.index_cast %arg1 : i32 to index
    %c3 = arith.constant 3 : index
    %7 = memref.load %arg5[%6, %c3] : memref<3x4xf32, #tpu.memory_space<smem>>
    %c0_0 = arith.constant 0 : index
    %c0_1 = arith.constant 0 : index
    %c0_2 = arith.constant 0 : index
    %c0_3 = arith.constant 0 : index
    %8 = vector.load %arg3[%c0_0, %c0_1, %c0_2, %c0_3] : memref<1x9x8x128xf32, #tpu.memory_space<vmem>>, vector<1x1x8x128xf32>
    %9 = vector.shape_cast %8 : vector<1x1x8x128xf32> to vector<8x128xf32>
    %c0_4 = arith.constant 0 : index
    %c1_5 = arith.constant 1 : index
    %c0_6 = arith.constant 0 : index
    %c0_7 = arith.constant 0 : index
    %10 = vector.load %arg3[%c0_4, %c1_5, %c0_6, %c0_7] : memref<1x9x8x128xf32, #tpu.memory_space<vmem>>, vector<1x1x8x128xf32>
    %11 = vector.shape_cast %10 : vector<1x1x8x128xf32> to vector<8x128xf32>
    %c0_8 = arith.constant 0 : index
    %c2_9 = arith.constant 2 : index
    %c0_10 = arith.constant 0 : index
    %c0_11 = arith.constant 0 : index
    %12 = vector.load %arg3[%c0_8, %c2_9, %c0_10, %c0_11] : memref<1x9x8x128xf32, #tpu.memory_space<vmem>>, vector<1x1x8x128xf32>
    %13 = vector.shape_cast %12 : vector<1x1x8x128xf32> to vector<8x128xf32>
    %c0_12 = arith.constant 0 : index
    %c3_13 = arith.constant 3 : index
    %c0_14 = arith.constant 0 : index
    %c0_15 = arith.constant 0 : index
    %14 = vector.load %arg3[%c0_12, %c3_13, %c0_14, %c0_15] : memref<1x9x8x128xf32, #tpu.memory_space<vmem>>, vector<1x1x8x128xf32>
    %15 = vector.shape_cast %14 : vector<1x1x8x128xf32> to vector<8x128xf32>
    %c0_16 = arith.constant 0 : index
    %c4 = arith.constant 4 : index
    %c0_17 = arith.constant 0 : index
    %c0_18 = arith.constant 0 : index
    %16 = vector.load %arg3[%c0_16, %c4, %c0_17, %c0_18] : memref<1x9x8x128xf32, #tpu.memory_space<vmem>>, vector<1x1x8x128xf32>
    %17 = vector.shape_cast %16 : vector<1x1x8x128xf32> to vector<8x128xf32>
    %c0_19 = arith.constant 0 : index
    %c0_20 = arith.constant 0 : index
    %c0_21 = arith.constant 0 : index
    %c0_22 = arith.constant 0 : index
    %18 = vector.load %arg4[%c0_19, %c0_20, %c0_21, %c0_22] : memref<1x6x8x128xf32, #tpu.memory_space<vmem>>, vector<1x1x8x128xf32>
    %19 = vector.shape_cast %18 : vector<1x1x8x128xf32> to vector<8x128xf32>
    %c0_23 = arith.constant 0 : index
    %c1_24 = arith.constant 1 : index
    %c0_25 = arith.constant 0 : index
    %c0_26 = arith.constant 0 : index
    %20 = vector.load %arg4[%c0_23, %c1_24, %c0_25, %c0_26] : memref<1x6x8x128xf32, #tpu.memory_space<vmem>>, vector<1x1x8x128xf32>
    %21 = vector.shape_cast %20 : vector<1x1x8x128xf32> to vector<8x128xf32>
    %c0_27 = arith.constant 0 : index
    %c2_28 = arith.constant 2 : index
    %c0_29 = arith.constant 0 : index
    %c0_30 = arith.constant 0 : index
    %22 = vector.load %arg4[%c0_27, %c2_28, %c0_29, %c0_30] : memref<1x6x8x128xf32, #tpu.memory_space<vmem>>, vector<1x1x8x128xf32>
    %23 = vector.shape_cast %22 : vector<1x1x8x128xf32> to vector<8x128xf32>
    %c0_31 = arith.constant 0 : index
    %c3_32 = arith.constant 3 : index
    %c0_33 = arith.constant 0 : index
    %c0_34 = arith.constant 0 : index
    %24 = vector.load %arg4[%c0_31, %c3_32, %c0_33, %c0_34] : memref<1x6x8x128xf32, #tpu.memory_space<vmem>>, vector<1x1x8x128xf32>
    %25 = vector.shape_cast %24 : vector<1x1x8x128xf32> to vector<8x128xf32>
    %c0_35 = arith.constant 0 : index
    %c4_36 = arith.constant 4 : index
    %c0_37 = arith.constant 0 : index
    %c0_38 = arith.constant 0 : index
    %26 = vector.load %arg4[%c0_35, %c4_36, %c0_37, %c0_38] : memref<1x6x8x128xf32, #tpu.memory_space<vmem>>, vector<1x1x8x128xf32>
    %27 = vector.shape_cast %26 : vector<1x1x8x128xf32> to vector<8x128xf32>
    %c0_39 = arith.constant 0 : index
    %c5 = arith.constant 5 : index
    %c0_40 = arith.constant 0 : index
    %c0_41 = arith.constant 0 : index
    %28 = vector.load %arg4[%c0_39, %c5, %c0_40, %c0_41] : memref<1x6x8x128xf32, #tpu.memory_space<vmem>>, vector<1x1x8x128xf32>
    %29 = vector.shape_cast %28 : vector<1x1x8x128xf32> to vector<8x128xf32>
    %30 = tpu.iota {dimensions = array<i32: 0>} : vector<8x128xi32>
    %31 = tpu.iota {dimensions = array<i32: 1>} : vector<8x128xi32>
    %c1_i32 = arith.constant 1 : i32
    %32 = arith.muli %arg0, %c1_i32 : i32
    %33 = arith.addi %32, %arg2 : i32
    %c1024_i32 = arith.constant 1024 : i32
    %34 = arith.muli %33, %c1024_i32 : i32
    %c128_i32 = arith.constant 128 : i32
    %35 = vector.broadcast %c128_i32 : i32 to vector<8x128xi32>
    %36 = arith.muli %30, %35 : vector<8x128xi32>
    %37 = vector.broadcast %34 : i32 to vector<8x128xi32>
    %38 = arith.addi %37, %36 : vector<8x128xi32>
    %39 = arith.addi %38, %31 : vector<8x128xi32>
    %c128_i32_42 = arith.constant 128 : i32
    %40 = vector.broadcast %c128_i32_42 : i32 to vector<8x128xi32>
    %41 = arith.cmpi slt, %39, %40 : vector<8x128xi32>
    %cst = arith.constant 1.000000e+00 : f32
    %42 = vector.broadcast %cst : f32 to vector<8x128xf32>
    %43 = arith.cmpf oeq, %19, %42 : vector<8x128xf32>
    %44 = arith.andi %43, %41 : vector<8x128xi1>
    %cst_43 = arith.constant 0.000000e+00 : f32
    %45 = vector.broadcast %cst_43 : f32 to vector<8x128xf32>
    %46 = arith.cmpf oeq, %19, %45 : vector<8x128xf32>
    %47 = arith.andi %46, %41 : vector<8x128xi1>
    %48 = math.absf %9 : vector<8x128xf32>
    %cst_44 = arith.constant 0.000000e+00 : f32
    %49 = vector.broadcast %cst_44 : f32 to vector<8x128xf32>
    %50 = arith.subf %49, %48 : vector<8x128xf32>
    %51 = math.exp %50 : vector<8x128xf32>
    %cst_45 = arith.constant 0.000000e+00 : f32
    %52 = vector.broadcast %cst_45 : f32 to vector<8x128xf32>
    %53 = arith.maximumf %9, %52 : vector<8x128xf32>
    %54 = arith.mulf %9, %19 : vector<8x128xf32>
    %55 = arith.subf %53, %54 : vector<8x128xf32>
    %cst_46 = arith.constant 1.000000e+00 : f32
    %56 = vector.broadcast %cst_46 : f32 to vector<8x128xf32>
    %57 = arith.addf %56, %51 : vector<8x128xf32>
    %58 = math.log %57 : vector<8x128xf32>
    %59 = arith.addf %55, %58 : vector<8x128xf32>
    %cst_47 = arith.constant 0.000000e+00 : f32
    %60 = vector.broadcast %cst_47 : f32 to vector<8x128xf32>
    %61 = arith.cmpf oge, %9, %60 : vector<8x128xf32>
    %cst_48 = arith.constant 1.000000e+00 : f32
    %62 = vector.broadcast %cst_48 : f32 to vector<8x128xf32>
    %63 = arith.select %61, %62, %51 : vector<8x128xi1>, vector<8x128xf32>
    %cst_49 = arith.constant 1.000000e+00 : f32
    %64 = vector.broadcast %cst_49 : f32 to vector<8x128xf32>
    %65 = arith.addf %64, %51 : vector<8x128xf32>
    %66 = arith.divf %63, %65 : vector<8x128xf32>
    %67 = arith.negf %11 : vector<8x128xf32>
    %68 = math.exp %67 : vector<8x128xf32>
    %cst_50 = arith.constant 1.000000e+00 : f32
    %69 = vector.broadcast %cst_50 : f32 to vector<8x128xf32>
    %70 = arith.addf %69, %68 : vector<8x128xf32>
    %71 = arith.divf %69, %70 : vector<8x128xf32>
    %72 = arith.negf %13 : vector<8x128xf32>
    %73 = math.exp %72 : vector<8x128xf32>
    %cst_51 = arith.constant 1.000000e+00 : f32
    %74 = vector.broadcast %cst_51 : f32 to vector<8x128xf32>
    %75 = arith.addf %74, %73 : vector<8x128xf32>
    %76 = arith.divf %74, %75 : vector<8x128xf32>
    %77 = math.exp %15 : vector<8x128xf32>
    %78 = vector.broadcast %1 : f32 to vector<8x128xf32>
    %79 = arith.mulf %77, %78 : vector<8x128xf32>
    %80 = math.exp %17 : vector<8x128xf32>
    %81 = vector.broadcast %3 : f32 to vector<8x128xf32>
    %82 = arith.mulf %80, %81 : vector<8x128xf32>
    %cst_52 = arith.constant 5.000000e-01 : f32
    %83 = vector.broadcast %cst_52 : f32 to vector<8x128xf32>
    %84 = arith.mulf %79, %83 : vector<8x128xf32>
    %85 = arith.subf %71, %84 : vector<8x128xf32>
    %cst_53 = arith.constant 5.000000e-01 : f32
    %86 = vector.broadcast %cst_53 : f32 to vector<8x128xf32>
    %87 = arith.mulf %82, %86 : vector<8x128xf32>
    %88 = arith.subf %76, %87 : vector<8x128xf32>
    %cst_54 = arith.constant 5.000000e-01 : f32
    %89 = vector.broadcast %cst_54 : f32 to vector<8x128xf32>
    %90 = arith.mulf %79, %89 : vector<8x128xf32>
    %91 = arith.addf %71, %90 : vector<8x128xf32>
    %cst_55 = arith.constant 5.000000e-01 : f32
    %92 = vector.broadcast %cst_55 : f32 to vector<8x128xf32>
    %93 = arith.mulf %82, %92 : vector<8x128xf32>
    %94 = arith.addf %76, %93 : vector<8x128xf32>
    %cst_56 = arith.constant 5.000000e-01 : f32
    %95 = vector.broadcast %cst_56 : f32 to vector<8x128xf32>
    %96 = arith.mulf %25, %95 : vector<8x128xf32>
    %97 = arith.subf %21, %96 : vector<8x128xf32>
    %cst_57 = arith.constant 5.000000e-01 : f32
    %98 = vector.broadcast %cst_57 : f32 to vector<8x128xf32>
    %99 = arith.mulf %27, %98 : vector<8x128xf32>
    %100 = arith.subf %23, %99 : vector<8x128xf32>
    %cst_58 = arith.constant 5.000000e-01 : f32
    %101 = vector.broadcast %cst_58 : f32 to vector<8x128xf32>
    %102 = arith.mulf %25, %101 : vector<8x128xf32>
    %103 = arith.addf %21, %102 : vector<8x128xf32>
    %cst_59 = arith.constant 5.000000e-01 : f32
    %104 = vector.broadcast %cst_59 : f32 to vector<8x128xf32>
    %105 = arith.mulf %27, %104 : vector<8x128xf32>
    %106 = arith.addf %23, %105 : vector<8x128xf32>
    %107 = arith.minimumf %91, %103 : vector<8x128xf32>
    %108 = arith.maximumf %85, %97 : vector<8x128xf32>
    %109 = arith.subf %107, %108 : vector<8x128xf32>
    %cst_60 = arith.constant 0.000000e+00 : f32
    %110 = vector.broadcast %cst_60 : f32 to vector<8x128xf32>
    %111 = arith.maximumf %109, %110 : vector<8x128xf32>
    %112 = arith.minimumf %94, %106 : vector<8x128xf32>
    %113 = arith.maximumf %88, %100 : vector<8x128xf32>
    %114 = arith.subf %112, %113 : vector<8x128xf32>
    %cst_61 = arith.constant 0.000000e+00 : f32
    %115 = vector.broadcast %cst_61 : f32 to vector<8x128xf32>
    %116 = arith.maximumf %114, %115 : vector<8x128xf32>
    %117 = arith.mulf %111, %116 : vector<8x128xf32>
    %118 = arith.subf %91, %85 : vector<8x128xf32>
    %119 = arith.subf %94, %88 : vector<8x128xf32>
    %120 = arith.mulf %118, %119 : vector<8x128xf32>
    %121 = math.absf %120 : vector<8x128xf32>
    %122 = arith.subf %103, %97 : vector<8x128xf32>
    %123 = arith.subf %106, %100 : vector<8x128xf32>
    %124 = arith.mulf %122, %123 : vector<8x128xf32>
    %125 = math.absf %124 : vector<8x128xf32>
    %126 = arith.addf %121, %125 : vector<8x128xf32>
    %127 = arith.subf %126, %117 : vector<8x128xf32>
    %cst_62 = arith.constant 9.99999997E-7 : f32
    %128 = vector.broadcast %cst_62 : f32 to vector<8x128xf32>
    %129 = arith.addf %127, %128 : vector<8x128xf32>
    %130 = tpu.reciprocal %129 {approx = true} : vector<8x128xf32> -> vector<8x128xf32>
    %131 = arith.mulf %129, %130 : vector<8x128xf32>
    %cst_63 = arith.constant 2.000000e+00 : f32
    %132 = vector.broadcast %cst_63 : f32 to vector<8x128xf32>
    %133 = arith.subf %132, %131 : vector<8x128xf32>
    %134 = arith.mulf %130, %133 : vector<8x128xf32>
    %135 = arith.mulf %117, %134 : vector<8x128xf32>
    %136 = arith.mulf %135, %19 : vector<8x128xf32>
    %137 = arith.subf %66, %136 : vector<8x128xf32>
    %138 = arith.mulf %137, %137 : vector<8x128xf32>
    %139 = vector.broadcast %5 : f32 to vector<8x128xf32>
    %140 = arith.mulf %25, %139 : vector<8x128xf32>
    %cst_64 = arith.constant 9.99999997E-7 : f32
    %141 = vector.broadcast %cst_64 : f32 to vector<8x128xf32>
    %142 = arith.addf %141, %140 : vector<8x128xf32>
    %143 = math.log %142 : vector<8x128xf32>
    %144 = vector.broadcast %7 : f32 to vector<8x128xf32>
    %145 = arith.mulf %27, %144 : vector<8x128xf32>
    %cst_65 = arith.constant 9.99999997E-7 : f32
    %146 = vector.broadcast %cst_65 : f32 to vector<8x128xf32>
    %147 = arith.addf %146, %145 : vector<8x128xf32>
    %148 = math.log %147 : vector<8x128xf32>
    %149 = arith.subf %71, %21 : vector<8x128xf32>
    %150 = arith.mulf %149, %149 : vector<8x128xf32>
    %151 = arith.subf %76, %23 : vector<8x128xf32>
    %152 = arith.mulf %151, %151 : vector<8x128xf32>
    %153 = arith.addf %150, %152 : vector<8x128xf32>
    %154 = arith.subf %15, %143 : vector<8x128xf32>
    %155 = arith.mulf %154, %154 : vector<8x128xf32>
    %156 = arith.addf %153, %155 : vector<8x128xf32>
    %157 = arith.subf %17, %148 : vector<8x128xf32>
    %158 = arith.mulf %157, %157 : vector<8x128xf32>
    %159 = arith.addf %156, %158 : vector<8x128xf32>
    %c0_66 = arith.constant 0 : index
    %c5_67 = arith.constant 5 : index
    %c0_68 = arith.constant 0 : index
    %c0_69 = arith.constant 0 : index
    %160 = vector.load %arg3[%c0_66, %c5_67, %c0_68, %c0_69] : memref<1x9x8x128xf32, #tpu.memory_space<vmem>>, vector<1x1x8x128xf32>
    %161 = vector.shape_cast %160 : vector<1x1x8x128xf32> to vector<8x128xf32>
    %c0_70 = arith.constant 0 : index
    %c6 = arith.constant 6 : index
    %c0_71 = arith.constant 0 : index
    %c0_72 = arith.constant 0 : index
    %162 = vector.load %arg3[%c0_70, %c6, %c0_71, %c0_72] : memref<1x9x8x128xf32, #tpu.memory_space<vmem>>, vector<1x1x8x128xf32>
    %163 = vector.shape_cast %162 : vector<1x1x8x128xf32> to vector<8x128xf32>
    %164 = arith.maximumf %161, %163 : vector<8x128xf32>
    %c0_73 = arith.constant 0 : index
    %c7 = arith.constant 7 : index
    %c0_74 = arith.constant 0 : index
    %c0_75 = arith.constant 0 : index
    %165 = vector.load %arg3[%c0_73, %c7, %c0_74, %c0_75] : memref<1x9x8x128xf32, #tpu.memory_space<vmem>>, vector<1x1x8x128xf32>
    %166 = vector.shape_cast %165 : vector<1x1x8x128xf32> to vector<8x128xf32>
    %167 = arith.maximumf %164, %166 : vector<8x128xf32>
    %c0_76 = arith.constant 0 : index
    %c8 = arith.constant 8 : index
    %c0_77 = arith.constant 0 : index
    %c0_78 = arith.constant 0 : index
    %168 = vector.load %arg3[%c0_76, %c8, %c0_77, %c0_78] : memref<1x9x8x128xf32, #tpu.memory_space<vmem>>, vector<1x1x8x128xf32>
    %169 = vector.shape_cast %168 : vector<1x1x8x128xf32> to vector<8x128xf32>
    %170 = arith.maximumf %167, %169 : vector<8x128xf32>
    %cst_79 = arith.constant 0.000000e+00 : f32
    %171 = vector.broadcast %cst_79 : f32 to vector<8x128xf32>
    %cst_80 = arith.constant 0.000000e+00 : f32
    %172 = vector.broadcast %cst_80 : f32 to vector<8x128xf32>
    %c0_81 = arith.constant 0 : index
    %c5_82 = arith.constant 5 : index
    %c0_83 = arith.constant 0 : index
    %c0_84 = arith.constant 0 : index
    %173 = vector.load %arg3[%c0_81, %c5_82, %c0_83, %c0_84] : memref<1x9x8x128xf32, #tpu.memory_space<vmem>>, vector<1x1x8x128xf32>
    %174 = vector.shape_cast %173 : vector<1x1x8x128xf32> to vector<8x128xf32>
    %175 = arith.subf %174, %170 : vector<8x128xf32>
    %176 = math.exp %175 : vector<8x128xf32>
    %177 = arith.addf %171, %176 : vector<8x128xf32>
    %cst_85 = arith.constant 0.000000e+00 : f32
    %178 = vector.broadcast %cst_85 : f32 to vector<8x128xf32>
    %179 = arith.cmpf oeq, %29, %178 : vector<8x128xf32>
    %cst_86 = arith.constant 0.000000e+00 : f32
    %180 = vector.broadcast %cst_86 : f32 to vector<8x128xf32>
    %181 = arith.select %179, %174, %180 : vector<8x128xi1>, vector<8x128xf32>
    %182 = arith.addf %172, %181 : vector<8x128xf32>
    %c0_87 = arith.constant 0 : index
    %c6_88 = arith.constant 6 : index
    %c0_89 = arith.constant 0 : index
    %c0_90 = arith.constant 0 : index
    %183 = vector.load %arg3[%c0_87, %c6_88, %c0_89, %c0_90] : memref<1x9x8x128xf32, #tpu.memory_space<vmem>>, vector<1x1x8x128xf32>
    %184 = vector.shape_cast %183 : vector<1x1x8x128xf32> to vector<8x128xf32>
    %185 = arith.subf %184, %170 : vector<8x128xf32>
    %186 = math.exp %185 : vector<8x128xf32>
    %187 = arith.addf %177, %186 : vector<8x128xf32>
    %cst_91 = arith.constant 1.000000e+00 : f32
    %188 = vector.broadcast %cst_91 : f32 to vector<8x128xf32>
    %189 = arith.cmpf oeq, %29, %188 : vector<8x128xf32>
    %cst_92 = arith.constant 0.000000e+00 : f32
    %190 = vector.broadcast %cst_92 : f32 to vector<8x128xf32>
    %191 = arith.select %189, %184, %190 : vector<8x128xi1>, vector<8x128xf32>
    %192 = arith.addf %182, %191 : vector<8x128xf32>
    %c0_93 = arith.constant 0 : index
    %c7_94 = arith.constant 7 : index
    %c0_95 = arith.constant 0 : index
    %c0_96 = arith.constant 0 : index
    %193 = vector.load %arg3[%c0_93, %c7_94, %c0_95, %c0_96] : memref<1x9x8x128xf32, #tpu.memory_space<vmem>>, vector<1x1x8x128xf32>
    %194 = vector.shape_cast %193 : vector<1x1x8x128xf32> to vector<8x128xf32>
    %195 = arith.subf %194, %170 : vector<8x128xf32>
    %196 = math.exp %195 : vector<8x128xf32>
    %197 = arith.addf %187, %196 : vector<8x128xf32>
    %cst_97 = arith.constant 2.000000e+00 : f32
    %198 = vector.broadcast %cst_97 : f32 to vector<8x128xf32>
    %199 = arith.cmpf oeq, %29, %198 : vector<8x128xf32>
    %cst_98 = arith.constant 0.000000e+00 : f32
    %200 = vector.broadcast %cst_98 : f32 to vector<8x128xf32>
    %201 = arith.select %199, %194, %200 : vector<8x128xi1>, vector<8x128xf32>
    %202 = arith.addf %192, %201 : vector<8x128xf32>
    %c0_99 = arith.constant 0 : index
    %c8_100 = arith.constant 8 : index
    %c0_101 = arith.constant 0 : index
    %c0_102 = arith.constant 0 : index
    %203 = vector.load %arg3[%c0_99, %c8_100, %c0_101, %c0_102] : memref<1x9x8x128xf32, #tpu.memory_space<vmem>>, vector<1x1x8x128xf32>
    %204 = vector.shape_cast %203 : vector<1x1x8x128xf32> to vector<8x128xf32>
    %205 = arith.subf %204, %170 : vector<8x128xf32>
    %206 = math.exp %205 : vector<8x128xf32>
    %207 = arith.addf %197, %206 : vector<8x128xf32>
    %cst_103 = arith.constant 3.000000e+00 : f32
    %208 = vector.broadcast %cst_103 : f32 to vector<8x128xf32>
    %209 = arith.cmpf oeq, %29, %208 : vector<8x128xf32>
    %cst_104 = arith.constant 0.000000e+00 : f32
    %210 = vector.broadcast %cst_104 : f32 to vector<8x128xf32>
    %211 = arith.select %209, %204, %210 : vector<8x128xi1>, vector<8x128xf32>
    %212 = arith.addf %202, %211 : vector<8x128xf32>
    %213 = math.log %207 : vector<8x128xf32>
    %214 = arith.addf %170, %213 : vector<8x128xf32>
    %215 = arith.subf %214, %212 : vector<8x128xf32>
    %c0_i32 = arith.constant 0 : i32
    %216 = arith.cmpi eq, %arg2, %c0_i32 : i32
    %217 = arith.extui %216 : i1 to i32
    %c0_i32_105 = arith.constant 0 : i32
    %218 = arith.cmpi ne, %217, %c0_i32_105 : i32
    scf.if %218 {
      %cst_169 = arith.constant 0.000000e+00 : f32
      %264 = vector.broadcast %cst_169 : f32 to vector<6x8x128xf32>
      %c0_170 = arith.constant 0 : index
      %c0_171 = arith.constant 0 : index
      %c0_172 = arith.constant 0 : index
      %c0_173 = arith.constant 0 : index
      %c0_174 = arith.constant 0 : index
      %265 = vector.load %arg6[%c0_170, %c0_171, %c0_172, %c0_173, %c0_174] : memref<1x1x6x8x128xf32, #tpu.memory_space<vmem>>, vector<1x1x6x8x128xf32>
      %266 = vector.shape_cast %265 : vector<1x1x6x8x128xf32> to vector<6x8x128xf32>
      %267 = vector.shape_cast %264 : vector<6x8x128xf32> to vector<1x1x6x8x128xf32>
      tpu.vector_store %arg6[%c0_170, %c0_171, %c0_172, %c0_173, %c0_174], %267 {strides = array<i32>} : memref<1x1x6x8x128xf32, #tpu.memory_space<vmem>>, vector<1x1x6x8x128xf32>,
    } else {
    }
    %cst_106 = arith.constant 0.000000e+00 : f32
    %219 = vector.broadcast %cst_106 : f32 to vector<8x128xf32>
    %c0_107 = arith.constant 0 : index
    %c0_108 = arith.constant 0 : index
    %c0_109 = arith.constant 0 : index
    %c0_110 = arith.constant 0 : index
    %c0_111 = arith.constant 0 : index
    %220 = vector.load %arg6[%c0_107, %c0_108, %c0_109, %c0_110, %c0_111] : memref<1x1x6x8x128xf32, #tpu.memory_space<vmem>>, vector<1x1x1x8x128xf32>
    %221 = vector.shape_cast %220 : vector<1x1x1x8x128xf32> to vector<8x128xf32>
    %222 = arith.select %47, %59, %219 : vector<8x128xi1>, vector<8x128xf32>
    %223 = arith.addf %221, %222 : vector<8x128xf32>
    %c0_112 = arith.constant 0 : index
    %c0_113 = arith.constant 0 : index
    %c0_114 = arith.constant 0 : index
    %c0_115 = arith.constant 0 : index
    %c0_116 = arith.constant 0 : index
    %224 = vector.load %arg6[%c0_112, %c0_113, %c0_114, %c0_115, %c0_116] : memref<1x1x6x8x128xf32, #tpu.memory_space<vmem>>, vector<1x1x1x8x128xf32>
    %225 = vector.shape_cast %224 : vector<1x1x1x8x128xf32> to vector<8x128xf32>
    %226 = vector.shape_cast %223 : vector<8x128xf32> to vector<1x1x1x8x128xf32>
    tpu.vector_store %arg6[%c0_112, %c0_113, %c0_114, %c0_115, %c0_116], %226 {strides = array<i32>} : memref<1x1x6x8x128xf32, #tpu.memory_space<vmem>>, vector<1x1x1x8x128xf32>,
    %c0_117 = arith.constant 0 : index
    %c0_118 = arith.constant 0 : index
    %c1_119 = arith.constant 1 : index
    %c0_120 = arith.constant 0 : index
    %c0_121 = arith.constant 0 : index
    %227 = vector.load %arg6[%c0_117, %c0_118, %c1_119, %c0_120, %c0_121] : memref<1x1x6x8x128xf32, #tpu.memory_space<vmem>>, vector<1x1x1x8x128xf32>
    %228 = vector.shape_cast %227 : vector<1x1x1x8x128xf32> to vector<8x128xf32>
    %cst_122 = arith.constant 1.000000e+00 : f32
    %229 = vector.broadcast %cst_122 : f32 to vector<8x128xf32>
    %230 = arith.select %47, %229, %219 : vector<8x128xi1>, vector<8x128xf32>
    %231 = arith.addf %228, %230 : vector<8x128xf32>
    %c0_123 = arith.constant 0 : index
    %c0_124 = arith.constant 0 : index
    %c1_125 = arith.constant 1 : index
    %c0_126 = arith.constant 0 : index
    %c0_127 = arith.constant 0 : index
    %232 = vector.load %arg6[%c0_123, %c0_124, %c1_125, %c0_126, %c0_127] : memref<1x1x6x8x128xf32, #tpu.memory_space<vmem>>, vector<1x1x1x8x128xf32>
    %233 = vector.shape_cast %232 : vector<1x1x1x8x128xf32> to vector<8x128xf32>
    %234 = vector.shape_cast %231 : vector<8x128xf32> to vector<1x1x1x8x128xf32>
    tpu.vector_store %arg6[%c0_123, %c0_124, %c1_125, %c0_126, %c0_127], %234 {strides = array<i32>} : memref<1x1x6x8x128xf32, #tpu.memory_space<vmem>>, vector<1x1x1x8x128xf32>,
    %c0_128 = arith.constant 0 : index
    %c0_129 = arith.constant 0 : index
    %c2_130 = arith.constant 2 : index
    %c0_131 = arith.constant 0 : index
    %c0_132 = arith.constant 0 : index
    %235 = vector.load %arg6[%c0_128, %c0_129, %c2_130, %c0_131, %c0_132] : memref<1x1x6x8x128xf32, #tpu.memory_space<vmem>>, vector<1x1x1x8x128xf32>
    %236 = vector.shape_cast %235 : vector<1x1x1x8x128xf32> to vector<8x128xf32>
    %237 = arith.select %44, %138, %219 : vector<8x128xi1>, vector<8x128xf32>
    %238 = arith.addf %236, %237 : vector<8x128xf32>
    %c0_133 = arith.constant 0 : index
    %c0_134 = arith.constant 0 : index
    %c2_135 = arith.constant 2 : index
    %c0_136 = arith.constant 0 : index
    %c0_137 = arith.constant 0 : index
    %239 = vector.load %arg6[%c0_133, %c0_134, %c2_135, %c0_136, %c0_137] : memref<1x1x6x8x128xf32, #tpu.memory_space<vmem>>, vector<1x1x1x8x128xf32>
    %240 = vector.shape_cast %239 : vector<1x1x1x8x128xf32> to vector<8x128xf32>
    %241 = vector.shape_cast %238 : vector<8x128xf32> to vector<1x1x1x8x128xf32>
    tpu.vector_store %arg6[%c0_133, %c0_134, %c2_135, %c0_136, %c0_137], %241 {strides = array<i32>} : memref<1x1x6x8x128xf32, #tpu.memory_space<vmem>>, vector<1x1x1x8x128xf32>,
    %c0_138 = arith.constant 0 : index
    %c0_139 = arith.constant 0 : index
    %c3_140 = arith.constant 3 : index
    %c0_141 = arith.constant 0 : index
    %c0_142 = arith.constant 0 : index
    %242 = vector.load %arg6[%c0_138, %c0_139, %c3_140, %c0_141, %c0_142] : memref<1x1x6x8x128xf32, #tpu.memory_space<vmem>>, vector<1x1x1x8x128xf32>
    %243 = vector.shape_cast %242 : vector<1x1x1x8x128xf32> to vector<8x128xf32>
    %cst_143 = arith.constant 1.000000e+00 : f32
    %244 = vector.broadcast %cst_143 : f32 to vector<8x128xf32>
    %245 = arith.select %44, %244, %219 : vector<8x128xi1>, vector<8x128xf32>
    %246 = arith.addf %243, %245 : vector<8x128xf32>
    %c0_144 = arith.constant 0 : index
    %c0_145 = arith.constant 0 : index
    %c3_146 = arith.constant 3 : index
    %c0_147 = arith.constant 0 : index
    %c0_148 = arith.constant 0 : index
    %247 = vector.load %arg6[%c0_144, %c0_145, %c3_146, %c0_147, %c0_148] : memref<1x1x6x8x128xf32, #tpu.memory_space<vmem>>, vector<1x1x1x8x128xf32>
    %248 = vector.shape_cast %247 : vector<1x1x1x8x128xf32> to vector<8x128xf32>
    %249 = vector.shape_cast %246 : vector<8x128xf32> to vector<1x1x1x8x128xf32>
    tpu.vector_store %arg6[%c0_144, %c0_145, %c3_146, %c0_147, %c0_148], %249 {strides = array<i32>} : memref<1x1x6x8x128xf32, #tpu.memory_space<vmem>>, vector<1x1x1x8x128xf32>,
    %c0_149 = arith.constant 0 : index
    %c0_150 = arith.constant 0 : index
    %c4_151 = arith.constant 4 : index
    %c0_152 = arith.constant 0 : index
    %c0_153 = arith.constant 0 : index
    %250 = vector.load %arg6[%c0_149, %c0_150, %c4_151, %c0_152, %c0_153] : memref<1x1x6x8x128xf32, #tpu.memory_space<vmem>>, vector<1x1x1x8x128xf32>
    %251 = vector.shape_cast %250 : vector<1x1x1x8x128xf32> to vector<8x128xf32>
    %252 = arith.select %44, %159, %219 : vector<8x128xi1>, vector<8x128xf32>
    %253 = arith.addf %251, %252 : vector<8x128xf32>
    %c0_154 = arith.constant 0 : index
    %c0_155 = arith.constant 0 : index
    %c4_156 = arith.constant 4 : index
    %c0_157 = arith.constant 0 : index
    %c0_158 = arith.constant 0 : index
    %254 = vector.load %arg6[%c0_154, %c0_155, %c4_156, %c0_157, %c0_158] : memref<1x1x6x8x128xf32, #tpu.memory_space<vmem>>, vector<1x1x1x8x128xf32>
    %255 = vector.shape_cast %254 : vector<1x1x1x8x128xf32> to vector<8x128xf32>
    %256 = vector.shape_cast %253 : vector<8x128xf32> to vector<1x1x1x8x128xf32>
    tpu.vector_store %arg6[%c0_154, %c0_155, %c4_156, %c0_157, %c0_158], %256 {strides = array<i32>} : memref<1x1x6x8x128xf32, #tpu.memory_space<vmem>>, vector<1x1x1x8x128xf32>,
    %c0_159 = arith.constant 0 : index
    %c0_160 = arith.constant 0 : index
    %c5_161 = arith.constant 5 : index
    %c0_162 = arith.constant 0 : index
    %c0_163 = arith.constant 0 : index
    %257 = vector.load %arg6[%c0_159, %c0_160, %c5_161, %c0_162, %c0_163] : memref<1x1x6x8x128xf32, #tpu.memory_space<vmem>>, vector<1x1x1x8x128xf32>
    %258 = vector.shape_cast %257 : vector<1x1x1x8x128xf32> to vector<8x128xf32>
    %259 = arith.select %44, %215, %219 : vector<8x128xi1>, vector<8x128xf32>
    %260 = arith.addf %258, %259 : vector<8x128xf32>
    %c0_164 = arith.constant 0 : index
    %c0_165 = arith.constant 0 : index
    %c5_166 = arith.constant 5 : index
    %c0_167 = arith.constant 0 : index
    %c0_168 = arith.constant 0 : index
    %261 = vector.load %arg6[%c0_164, %c0_165, %c5_166, %c0_167, %c0_168] : memref<1x1x6x8x128xf32, #tpu.memory_space<vmem>>, vector<1x1x1x8x128xf32>
    %262 = vector.shape_cast %261 : vector<1x1x1x8x128xf32> to vector<8x128xf32>
    %263 = vector.shape_cast %260 : vector<8x128xf32> to vector<1x1x1x8x128xf32>
    tpu.vector_store %arg6[%c0_164, %c0_165, %c5_166, %c0_167, %c0_168], %263 {strides = array<i32>} : memref<1x1x6x8x128xf32, #tpu.memory_space<vmem>>, vector<1x1x1x8x128xf32>,
    return
  }
  func.func @transform_0(%arg0: i32, %arg1: i32, %arg2: i32) -> (i32, i32, i32, i32) {
    %c1_i32 = arith.constant 1 : i32
    %0 = arith.muli %arg0, %c1_i32 : i32
    %1 = arith.addi %0, %arg2 : i32
    %c0_i32 = arith.constant 0 : i32
    %c0_i32_0 = arith.constant 0 : i32
    %c0_i32_1 = arith.constant 0 : i32
    return %arg1, %c0_i32, %1, %c0_i32_0 : i32, i32, i32, i32
  }
  func.func @transform_1(%arg0: i32, %arg1: i32, %arg2: i32) -> (i32, i32, i32, i32) {
    %c1_i32 = arith.constant 1 : i32
    %0 = arith.muli %arg0, %c1_i32 : i32
    %1 = arith.addi %0, %arg2 : i32
    %c0_i32 = arith.constant 0 : i32
    %c0_i32_0 = arith.constant 0 : i32
    %c0_i32_1 = arith.constant 0 : i32
    return %arg1, %c0_i32, %1, %c0_i32_0 : i32, i32, i32, i32
  }
  func.func @transform_2(%arg0: i32, %arg1: i32, %arg2: i32) -> (i32, i32) {
    %c0_i32 = arith.constant 0 : i32
    %c0_i32_0 = arith.constant 0 : i32
    %c0_i32_1 = arith.constant 0 : i32
    return %c0_i32, %c0_i32_0 : i32, i32
  }
  func.func @transform_3(%arg0: i32, %arg1: i32, %arg2: i32) -> (i32, i32, i32, i32, i32) {
    %c0_i32 = arith.constant 0 : i32
    %c0_i32_0 = arith.constant 0 : i32
    %c0_i32_1 = arith.constant 0 : i32
    %c0_i32_2 = arith.constant 0 : i32
    return %arg0, %arg1, %c0_i32, %c0_i32_0, %c0_i32_1 : i32, i32, i32, i32, i32
  }
}

</mosaic_0001>

<llo_original>
// kernel: yolo_loss_pallas.1
$region0: #{yolo_loss_pallas.1}
  #allocation0 [shape = 'u32[]', space=smem, size = 0x4, offset = 0x4, fixed_abs, tag = 'smem constant byte address 0x4 - core index']
  #allocation1 [shape = 'u32[144,128]{1,0:T(1,128)}', space=vmem, size = 0x12000, scoped, tag = 'internal scratch']
  %s0 = inlined_call_operand.vmem [shape: f32[3,9,8,128], index: 0, kind: input, shape index: {}]
  %s1 = inlined_call_operand.vmem [shape: f32[3,6,8,128], index: 1, kind: input, shape index: {}]
  %s2 = inlined_call_operand.vmem [shape: f32[3,4], index: 2, kind: input, shape index: {}]
  %s3 = inlined_call_operand.vmem [shape: f32[1,3,6,8,128], index: 3, kind: output, shape index: {}]
  %s4 = sld [smem:[#allocation0]]
  $region53: #{yolo_loss_pallas.1} parent=0
    _
  %s6 = ssub.s32 1, %s4
  %s7 = scalar_select 0, %s6, %s4
  $region1: #{yolo_loss_pallas.1} parent=0
    #allocation2 [shape = 'u8[2048]{0}', space=smem, size = 0x800, scoped, tag = 'input window, operand 2, single buffered']
    #allocation3 [shape = 's32[2]{0}', space=sflag, size = 0x8, scoped, tag = 'scoped memory for yolo_loss_pallas.1']
    %8 = vsyncpa [#allocation3], 0
    loop: start=0, step=1, limit=5
    $region2: #{yolo_loss_pallas.1} parent=1 // loop_pre_header
      _
    $region3: #{yolo_loss_pallas.1} parent=1 // loop_header
      %s10 = sphi 0, %s14
      %p11 = scmp.ge.s32.totalorder %s10, 5
      %s17 = sphi 0, %s36
      %s18 = sphi 0, %s32
      %s19 = sphi 0, %s28
      %s20 = sphi 0, %s17
      %s21 = sphi 0, %s18
      %s22 = sphi 0, %s19
      %s23 = sphi 0, %s20
      %s24 = sphi 0, %s21
      %s25 = sphi 0, %s22
      %s43 = sphi 0, %s45
      %s46 = sphi 0, %s43
      %s47 = sphi 0, %s46
      %s63 = sphi 0, %s47
      %s73 = sphi 0, %s75
      %s76 = sphi 0, %s73
      %s77 = sphi 0, %s76
      %s93 = sphi 0, %s77
      %s97 = sphi 0, %s97
      %s99 = sphi 0, %s97
      %s100 = sphi 0, %s99
      %s114 = sphi 0, %s100
      %s122 = sphi 0, %s124
      %s125 = sphi 0, %s122
      %s126 = sphi 0, %s125
      %s142 = sphi 0, %s126
    $region4: #{yolo_loss_pallas.1} parent=1 // loop_header_branch
      %13 = sbr.rel (%p11) target = $region8
    $region5: #{yolo_loss_pallas.1} parent=1 // loop_body
      %s15 = ssub.s32 %s10, 1
      %s16 = ssub.s32 %s10, 2
      %s26 = sadd.s32 1, %s19
      %p27 = scmp.ge.s32.totalorder %s26, 1
      %s28 = scalar_select %p27, 0, %s26
      %s29 = sadd.s32 1, %s18
      %s30 = scalar_select %p27, %s29, %s18
      %p31 = scmp.ge.s32.totalorder %s30, 3
      %s32 = scalar_select %p31, 0, %s30
      %s33 = sadd.s32 1, %s17
      %s34 = scalar_select %p31, %s33, %s17
      %p35 = scmp.ge.s32.totalorder %s34, 1
      %s36 = scalar_select %p35, 0, %s34
      %s37 = sadd.s32 %s17, %s19
      %s38 = sadd.s32 %s36, %s28
      %s39 = ssub.s32 %s18, %s32
      %s40 = ssub.s32 %s37, %s38
      %s41 = sor.u32 %s39, %s40
      %p42 = scmp.eq.s32.totalorder %s41, 0
      %s44 = sadd.s32 %s43, 1
      %s45 = scalar_select %p42, %s43, %s44
      %p48 = pneg %p42
      %p49 = scmp.eq.s32.totalorder %s10, 2
      %p50 = por %p48, %p49
      %p51 = scmp.ne.s32.totalorder %s43, %s46
      %p52 = scmp.eq.s32.totalorder %s10, 0
      %p53 = por %p51, %p52
      %p54 = scmp.ne.s32.totalorder %s43, %s46
      %p55 = scmp.eq.s32.totalorder %s15, 2
      %p56 = por %p54, %p55
      %p57 = scmp.ne.s32.totalorder %s46, %s47
      %p58 = scmp.eq.s32.totalorder %s15, 0
      %p59 = por %p57, %p58
      %p60 = scmp.ne.s32.totalorder %s46, %s47
      %p61 = scmp.eq.s32.totalorder %s16, 2
      %p62 = por %p60, %p61
      %p64 = scmp.ne.s32.totalorder %s47, %s63
      %p65 = scmp.eq.s32.totalorder %s16, 0
      %p66 = por %p64, %p65
      %s67 = sadd.s32 %s17, %s19
      %s68 = sadd.s32 %s36, %s28
      %s69 = ssub.s32 %s18, %s32
      %s70 = ssub.s32 %s67, %s68
      %s71 = sor.u32 %s69, %s70
      %p72 = scmp.eq.s32.totalorder %s71, 0
      %s74 = sadd.s32 %s73, 1
      %s75 = scalar_select %p72, %s73, %s74
      %p78 = pneg %p72
      %p79 = scmp.eq.s32.totalorder %s10, 2
      %p80 = por %p78, %p79
      %p81 = scmp.ne.s32.totalorder %s73, %s76
      %p82 = scmp.eq.s32.totalorder %s10, 0
      %p83 = por %p81, %p82
      %p84 = scmp.ne.s32.totalorder %s73, %s76
      %p85 = scmp.eq.s32.totalorder %s15, 2
      %p86 = por %p84, %p85
      %p87 = scmp.ne.s32.totalorder %s76, %s77
      %p88 = scmp.eq.s32.totalorder %s15, 0
      %p89 = por %p87, %p88
      %p90 = scmp.ne.s32.totalorder %s76, %s77
      %p91 = scmp.eq.s32.totalorder %s16, 2
      %p92 = por %p90, %p91
      %p94 = scmp.ne.s32.totalorder %s77, %s93
      %p95 = scmp.eq.s32.totalorder %s16, 0
      %p96 = por %p94, %p95
      %s98 = sadd.s32 %s97, 1
      %p101 = scmp.eq.s32.totalorder %s10, 2
      %p102 = scmp.ne.s32.totalorder %s97, %s99
      %p103 = scmp.eq.s32.totalorder %s10, 0
      %p104 = por %p102, %p103
      %p105 = scmp.ne.s32.totalorder %s97, %s99
      %p106 = scmp.eq.s32.totalorder %s15, 2
      %p107 = por %p105, %p106
      %p108 = scmp.ne.s32.totalorder %s99, %s100
      %p109 = scmp.eq.s32.totalorder %s15, 0
      %p110 = por %p108, %p109
      %p111 = scmp.ne.s32.totalorder %s99, %s100
      %p112 = scmp.eq.s32.totalorder %s16, 2
      %p113 = por %p111, %p112
      %p115 = scmp.ne.s32.totalorder %s100, %s114
      %p116 = scmp.eq.s32.totalorder %s16, 0
      %p117 = por %p115, %p116
      %s118 = ssub.s32 %s17, %s36
      %s119 = ssub.s32 %s18, %s32
      %s120 = sor.u32 %s118, %s119
      %p121 = scmp.eq.s32.totalorder %s120, 0
      %s123 = sadd.s32 %s122, 1
      %s124 = scalar_select %p121, %s122, %s123
      %p127 = pneg %p121
      %p128 = scmp.eq.s32.totalorder %s10, 2
      %p129 = por %p127, %p128
      %p130 = scmp.ne.s32.totalorder %s122, %s125
      %p131 = scmp.eq.s32.totalorder %s10, 0
      %p132 = por %p130, %p131
      %p133 = scmp.ne.s32.totalorder %s122, %s125
      %p134 = scmp.eq.s32.totalorder %s15, 2
      %p135 = por %p133, %p134
      %p136 = scmp.ne.s32.totalorder %s125, %s126
      %p137 = scmp.eq.s32.totalorder %s15, 0
      %p138 = por %p136, %p137
      %p139 = scmp.ne.s32.totalorder %s125, %s126
      %p140 = scmp.eq.s32.totalorder %s16, 2
      %p141 = por %p139, %p140
      %p143 = scmp.ne.s32.totalorder %s126, %s142
      %p144 = scmp.eq.s32.totalorder %s16, 0
      %p145 = por %p143, %p144
      %p146 = scmp.le.s32.totalorder 1, %s10
      %p147 = scmp.lt.s32.totalorder %s10, 4
      %p148 = pnand %p146, %p147
      %p149 = pneg %p148
      // Predicated region
      $region9: #{yolo_loss_pallas.1} parent=5 // pred_check
        _
      $region10: #{yolo_loss_pallas.1} parent=5 // pred_check_branch
        %151 = sbr.rel (%p148) target = $region12
      $region11: #{yolo_loss_pallas.1} parent=5 // pred_region
        %s152 = ssub.s32 %s10, 1
        // Predicated region
        $region13: #{yolo_loss_pallas.1} parent=11 // pred_check
          %p153 = pneg %p110
        $region14: #{yolo_loss_pallas.1} parent=11 // pred_check_branch
          %155 = sbr.rel (%p153) target = $region16
        $region15: #{yolo_loss_pallas.1} parent=11 // pred_region
          %s157 = ssub.s32 64, 64
          %158 = vsyncadd [#allocation3], %s157
          %s160 = sshll.u32 %s2, 4
          %s161 = int_to_ptr.vmem [resolvable:$true] %s160
          %163 = dma.vmem_to_smem %s161, 64, [#allocation2], [#allocation3]
        $region16: #{yolo_loss_pallas.1} parent=11 // pred_fallthru
          _
      $region12: #{yolo_loss_pallas.1} parent=5 // pred_fallthru
        _
      %p164 = scmp.lt.s32.totalorder %s10, 3
      // Predicated region
      $region17: #{yolo_loss_pallas.1} parent=5 // pred_check
        %p165 = pneg %p164
      $region18: #{yolo_loss_pallas.1} parent=5 // pred_check_branch
        %167 = sbr.rel (%p165) target = $region20
      $region19: #{yolo_loss_pallas.1} parent=5 // pred_region
        // Predicated region
        $region21: #{yolo_loss_pallas.1} parent=19 // pred_check
          %p168 = pneg %p53
        $region22: #{yolo_loss_pallas.1} parent=19 // pred_check_branch
          %170 = sbr.rel (%p168) target = $region24
        $region23: #{yolo_loss_pallas.1} parent=19 // pred_region
          %s171 = sadd.s32 %s17, %s19
          %p172 = scmp.lt.s32.totalorder %s18, 2
          %s173 = scalar_select %p172, %s18, 2
          %p174 = scmp.lt.s32.totalorder %s171, 0
          %s175 = scalar_select %p174, %s171, 0
          %s176 = smul.addr %s173, 9
          %s177 = sadd.s32 %s175, %s176
          %s178 = smul.addr %s177, 8
          %s179 = scalar_lea.vmem %s0, %s178
          %s180 = sadd.s32 %s17, %s19
        $region24: #{yolo_loss_pallas.1} parent=19 // pred_fallthru
          _
        // Predicated region
        $region25: #{yolo_loss_pallas.1} parent=19 // pred_check
          %p181 = pneg %p83
        $region26: #{yolo_loss_pallas.1} parent=19 // pred_check_branch
          %183 = sbr.rel (%p181) target = $region28
        $region27: #{yolo_loss_pallas.1} parent=19 // pred_region
          %s184 = sadd.s32 %s17, %s19
          %p185 = scmp.lt.s32.totalorder %s18, 2
          %s186 = scalar_select %p185, %s18, 2
          %p187 = scmp.lt.s32.totalorder %s184, 0
          %s188 = scalar_select %p187, %s184, 0
          %s189 = smul.addr %s186, 6
          %s190 = sadd.s32 %s188, %s189
          %s191 = smul.addr %s190, 8
          %s192 = scalar_lea.vmem %s1, %s191
          %s193 = sadd.s32 %s17, %s19
        $region28: #{yolo_loss_pallas.1} parent=19 // pred_fallthru
          _
      $region20: #{yolo_loss_pallas.1} parent=5 // pred_fallthru
        _
      %p194 = scmp.le.s32.totalorder 1, %s10
      %p195 = scmp.lt.s32.totalorder %s10, 4
      %p196 = pnand %p194, %p195
      %p197 = pneg %p196
      // Predicated region
      $region29: #{yolo_loss_pallas.1} parent=5 // pred_check
        _
      $region30: #{yolo_loss_pallas.1} parent=5 // pred_check_branch
        %199 = sbr.rel (%p196) target = $region32
      $region31: #{yolo_loss_pallas.1} parent=5 // pred_region
        %s200 = ssub.s32 %s10, 1
        // Predicated region
        $region33: #{yolo_loss_pallas.1} parent=31 // pred_check
          %p201 = pneg %p110
        $region34: #{yolo_loss_pallas.1} parent=31 // pred_check_branch
          %203 = sbr.rel (%p201) target = $region36
        $region35: #{yolo_loss_pallas.1} parent=31 // pred_region
          %204 = dma.done [#allocation3], 64
        $region36: #{yolo_loss_pallas.1} parent=31 // pred_fallthru
          _
        %205 = sfence
        %s206 = sadd.s32 %s20, %s22
        %p207 = scmp.lt.s32.totalorder %s21, 2
        %s208 = scalar_select %p207, %s21, 2
        %p209 = scmp.lt.s32.totalorder %s206, 0
        %s210 = scalar_select %p209, %s206, 0
        %s211 = smul.addr %s208, 9
        %s212 = sadd.s32 %s210, %s211
        %s213 = smul.addr %s212, 8
        %s214 = scalar_lea.vmem %s0, %s213
        %p215 = pneg %p59
        %p216 = pneg %p56
        %s217 = sadd.s32 %s20, %s22
        %p218 = scmp.lt.s32.totalorder %s21, 2
        %s219 = scalar_select %p218, %s21, 2
        %p220 = scmp.lt.s32.totalorder %s217, 0
        %s221 = scalar_select %p220, %s217, 0
        %s222 = smul.addr %s219, 6
        %s223 = sadd.s32 %s221, %s222
        %s224 = smul.addr %s223, 8
        %s225 = scalar_lea.vmem %s1, %s224
        %p226 = pneg %p89
        %p227 = pneg %p86
        %p228 = pneg %p110
        %p229 = pneg %p107
        %p230 = pneg %p138
        %p231 = pneg %p135
        %p232 = scmp.lt.s32.totalorder %s20, 0
        %s233 = scalar_select %p232, %s20, 0
        %p234 = scmp.lt.s32.totalorder %s21, 2
        %s235 = scalar_select %p234, %s21, 2
        %s236 = smul.addr %s235, 6
        %s237 = smul.addr %s233, 18
        %s238 = sadd.s32 %s236, %s237
        %s239 = smul.addr %s238, 8
        %s240 = scalar_lea.vmem %s3, %s239
        %s241 = sadd.s32 %s20, %s22
        %p242 = scmp.lt.s32.totalorder %s21, 2
        %s243 = scalar_select %p242, %s21, 2
        %p244 = scmp.lt.s32.totalorder %s241, 0
        %s245 = scalar_select %p244, %s241, 0
        %s246 = smul.addr %s243, 9
        %s247 = sadd.s32 %s245, %s246
        %s248 = smul.addr %s247, 8
        %s249 = scalar_lea.vmem %s0, %s248
        %s250 = sadd.s32 %s20, %s22
        %s251 = sadd.s32 %s20, %s22
        %p252 = scmp.lt.s32.totalorder %s21, 2
        %s253 = scalar_select %p252, %s21, 2
        %p254 = scmp.lt.s32.totalorder %s251, 0
        %s255 = scalar_select %p254, %s251, 0
        %s256 = smul.addr %s253, 6
        %s257 = sadd.s32 %s255, %s256
        %s258 = smul.addr %s257, 8
        %s259 = scalar_lea.vmem %s1, %s258
        %s260 = sadd.s32 %s20, %s22
        %p261 = scmp.lt.s32.totalorder %s20, 0
        %s262 = scalar_select %p261, %s20, 0
        %p263 = scmp.lt.s32.totalorder %s21, 2
        %s264 = scalar_select %p263, %s21, 2
        %s265 = smul.addr %s264, 6
        %s266 = smul.addr %s262, 18
        %s267 = sadd.s32 %s265, %s266
        %s268 = smul.addr %s267, 8
        %s269 = scalar_lea.vmem %s3, %s268
        %s270 = smul.u32 %s21, 128
        %s271 = sld [smem:[#allocation2 + %s270]]
        %s272 = sadd.s32 %s270, 1
        %s273 = sld [smem:[#allocation2 + %s272]]
        %s274 = sadd.s32 %s270, 2
        %s275 = sld [smem:[#allocation2 + %s274]]
        %s276 = sadd.s32 %s270, 3
        %s277 = sld [smem:[#allocation2 + %s276]]
        %v278 = vld [vmem:[%s249] sm:$0xff]
        %s279 = scalar_lea.vmem %s249, 8
        %v280 = vld [vmem:[%s279] sm:$0xff]
        %s281 = scalar_lea.vmem %s249, 16
        %v282 = vld [vmem:[%s281] sm:$0xff]
        %s283 = scalar_lea.vmem %s249, 24
        %v284 = vld [vmem:[%s283] sm:$0xff]
        %s285 = scalar_lea.vmem %s249, 32
        %v286 = vld [vmem:[%s285] sm:$0xff]
        %v287 = vld [vmem:[%s259] sm:$0xff]
        %s288 = scalar_lea.vmem %s259, 8
        %v289 = vld [vmem:[%s288] sm:$0xff]
        %s290 = scalar_lea.vmem %s259, 16
        %v291 = vld [vmem:[%s290] sm:$0xff]
        %s292 = scalar_lea.vmem %s259, 24
        %v293 = vld [vmem:[%s292] sm:$0xff]
        %s294 = scalar_lea.vmem %s259, 32
        %v295 = vld [vmem:[%s294] sm:$0xff]
        %s296 = scalar_lea.vmem %s259, 40
        %v297 = vld [vmem:[%s296] sm:$0xff]
        %v298 = vlaneseq
        %v299 = vshrl.u32 %v298, 7
        %v300 = vlaneseq
        %v301 = vand.u32 %v300, 127
        %s302 = sadd.s32 %s20, %s22
        %s303 = smul.u32 %s302, 1024
        %v304 = vmul.u32 %v299, 128
        %v305 = vstv %s303
        %v306 = vadd.s32 %v305, %v304
        %v307 = vadd.s32 %v306, %v301
        %vm308 = vcmp.lt.s32.totalorder %v307, 128
        %vm309 = vcmp.eq.f32.partialorder %v287, 1.0
        %vm310 = vmand %vm309, %vm308
        %vm311 = vcmp.eq.f32.partialorder %v287, 0.0
        %vm312 = vmand %vm311, %vm308
        %v313 = vand.u32 2147483647, %v278
        %v314 = vsub.f32 0.0, %v313
        %v315 = vmul.f32 %v314, 1.442695
        %v316 = vpow.pop %v315
        %v317 = vmax.f32 %v278, 0.0
        %v318 = vmul.f32 %v278, %v287
        %v319 = vsub.f32 %v317, %v318
        %v320 = vadd.f32 %v316, 1.0
        %v321 = vlog2.pop %v320
        %v322 = vmul.f32 %v321, 0.6931472
        %v323 = vadd.f32 %v319, %v322
        %vm324 = vcmp.ge.f32.partialorder %v278, 0.0
        %v325 = vsel %vm324, 1.0, %v316
        %v326 = vrcp.pop %v320
        %v327 = vmul.f32 %v325, %v326
        %v328 = vxor.u32 %v280, 2147483648
        %v329 = vmul.f32 %v328, 1.442695
        %v330 = vpow.pop %v329
        %v331 = vadd.f32 %v330, 1.0
        %v332 = vrcp.pop %v331
        %v333 = vmul.f32 1.0, %v332
        %v334 = vxor.u32 %v282, 2147483648
        %v335 = vmul.f32 %v334, 1.442695
        %v336 = vpow.pop %v335
        %v337 = vadd.f32 %v336, 1.0
        %v338 = vrcp.pop %v337
        %v339 = vmul.f32 1.0, %v338
        %v340 = vmul.f32 %v284, 1.442695
        %v341 = vpow.pop %v340
        %v342 = vstv %s271
        %v343 = vmul.f32 %v341, %v342
        %v344 = vmul.f32 %v286, 1.442695
        %v345 = vpow.pop %v344
        %v346 = vstv %s273
        %v347 = vmul.f32 %v345, %v346
        %v348 = vmul.f32 %v343, 0.5
        %v349 = vsub.f32 %v333, %v348
        %v350 = vmul.f32 %v347, 0.5
        %v351 = vsub.f32 %v339, %v350
        %v352 = vadd.f32 %v333, %v348
        %v353 = vadd.f32 %v339, %v350
        %v354 = vmul.f32 %v293, 0.5
        %v355 = vsub.f32 %v289, %v354
        %v356 = vmul.f32 %v295, 0.5
        %v357 = vsub.f32 %v291, %v356
        %v358 = vadd.f32 %v289, %v354
        %v359 = vadd.f32 %v291, %v356
        %v360 = vmin.f32 %v352, %v358
        %v361 = vmax.f32 %v349, %v355
        %v362 = vsub.f32 %v360, %v361
        %v363 = vmax.f32 %v362, 0.0
        %v364 = vmin.f32 %v353, %v359
        %v365 = vmax.f32 %v351, %v357
        %v366 = vsub.f32 %v364, %v365
        %v367 = vmax.f32 %v366, 0.0
        %v368 = vmul.f32 %v363, %v367
        %v369 = vsub.f32 %v352, %v349
        %v370 = vsub.f32 %v353, %v351
        %v371 = vmul.f32 %v369, %v370
        %v372 = vand.u32 2147483647, %v371
        %v373 = vsub.f32 %v358, %v355
        %v374 = vsub.f32 %v359, %v357
        %v375 = vmul.f32 %v373, %v374
        %v376 = vand.u32 2147483647, %v375
        %v377 = vadd.f32 %v372, %v376
        %v378 = vsub.f32 %v377, %v368
        %v379 = vadd.f32 %v378, 1e-06
        %v380 = vrcp.pop %v379
        %v381 = vmul.f32 %v379, %v380
        %v382 = vsub.f32 2.0, %v381
        %v383 = vmul.f32 %v380, %v382
        %v384 = vmul.f32 %v368, %v383
        %v385 = vmul.f32 %v384, %v287
        %v386 = vsub.f32 %v327, %v385
        %v387 = vmul.f32 %v386, %v386
        %v388 = vstv %s275
        %v389 = vmul.f32 %v293, %v388
        %v390 = vadd.f32 %v389, 1e-06
        %v391 = vlog2.pop %v390
        %v392 = vmul.f32 %v391, 0.6931472
        %v393 = vstv %s277
        %v394 = vmul.f32 %v295, %v393
        %v395 = vadd.f32 %v394, 1e-06
        %v396 = vlog2.pop %v395
        %v397 = vmul.f32 %v396, 0.6931472
        %v398 = vsub.f32 %v333, %v289
        %v399 = vmul.f32 %v398, %v398
        %v400 = vsub.f32 %v339, %v291
        %v401 = vmul.f32 %v400, %v400
        %v402 = vadd.f32 %v399, %v401
        %v403 = vsub.f32 %v284, %v392
        %v404 = vmul.f32 %v403, %v403
        %v405 = vadd.f32 %v402, %v404
        %v406 = vsub.f32 %v286, %v397
        %v407 = vmul.f32 %v406, %v406
        %v408 = vadd.f32 %v405, %v407
        %s409 = scalar_lea.vmem %s249, 40
        %v410 = vld [vmem:[%s409] sm:$0xff]
        %s411 = scalar_lea.vmem %s249, 48
        %v412 = vld [vmem:[%s411] sm:$0xff]
        %v413 = vmax.f32 %v410, %v412
        %s414 = scalar_lea.vmem %s249, 56
        %v415 = vld [vmem:[%s414] sm:$0xff]
        %v416 = vmax.f32 %v413, %v415
        %s417 = scalar_lea.vmem %s249, 64
        %v418 = vld [vmem:[%s417] sm:$0xff]
        %v419 = vmax.f32 %v416, %v418
        %v420 = vsub.f32 %v410, %v419
        %v421 = vmul.f32 %v420, 1.442695
        %v422 = vpow.pop %v421
        %v423 = vadd.f32 %v422, 0.0
        %vm424 = vcmp.eq.f32.partialorder %v297, 0.0
        %v425 = vsel %vm424, %v410, 0.0
        %v426 = vadd.f32 %v425, 0.0
        %v427 = vsub.f32 %v412, %v419
        %v428 = vmul.f32 %v427, 1.442695
        %v429 = vpow.pop %v428
        %v430 = vadd.f32 %v423, %v429
        %vm431 = vcmp.eq.f32.partialorder %v297, 1.0
        %v432 = vsel %vm431, %v412, 0.0
        %v433 = vadd.f32 %v426, %v432
        %v434 = vsub.f32 %v415, %v419
        %v435 = vmul.f32 %v434, 1.442695
        %v436 = vpow.pop %v435
        %v437 = vadd.f32 %v430, %v436
        %vm438 = vcmp.eq.f32.partialorder %v297, 2.0
        %v439 = vsel %vm438, %v415, 0.0
        %v440 = vadd.f32 %v433, %v439
        %v441 = vsub.f32 %v418, %v419
        %v442 = vmul.f32 %v441, 1.442695
        %v443 = vpow.pop %v442
        %v444 = vadd.f32 %v437, %v443
        %vm445 = vcmp.eq.f32.partialorder %v297, 3.0
        %v446 = vsel %vm445, %v418, 0.0
        %v447 = vadd.f32 %v440, %v446
        %v448 = vlog2.pop %v444
        %v449 = vmul.f32 %v448, 0.6931472
        %v450 = vadd.f32 %v419, %v449
        %v451 = vsub.f32 %v450, %v447
        %p452 = scmp.eq.s32.totalorder %s22, 0
        // Predicated region
        $region37: #{yolo_loss_pallas.1} parent=31 // pred_check
          %p453 = pneg %p452
        $region38: #{yolo_loss_pallas.1} parent=31 // pred_check_branch
          %455 = sbr.rel (%p453) target = $region40
        $region39: #{yolo_loss_pallas.1} parent=31 // pred_region
          %456 = vst [vmem:[%s269] sm:$0xff] 0.0
          %457 = vst [vmem:[%s269 + $0x8] sm:$0xff] 0.0
          %458 = vst [vmem:[%s269 + $0x10] sm:$0xff] 0.0
          %459 = vst [vmem:[%s269 + $0x18] sm:$0xff] 0.0
          %460 = vst [vmem:[%s269 + $0x20] sm:$0xff] 0.0
          %461 = vst [vmem:[%s269 + $0x28] sm:$0xff] 0.0
        $region40: #{yolo_loss_pallas.1} parent=31 // pred_fallthru
          _
        %v462 = vld [vmem:[%s269] sm:$0xff]
        %v463 = vsel %vm312, %v323, 0.0
        %v464 = vadd.f32 %v462, %v463
        %465 = vst [vmem:[%s269] sm:$0xff] %v464
        %s466 = scalar_lea.vmem %s269, 8
        %v467 = vld [vmem:[%s466] sm:$0xff]
        %v468 = vsel %vm312, 1.0, 0.0
        %v469 = vadd.f32 %v467, %v468
        %470 = vst [vmem:[%s466] sm:$0xff] %v469
        %s471 = scalar_lea.vmem %s269, 16
        %v472 = vld [vmem:[%s471] sm:$0xff]
        %v473 = vsel %vm310, %v387, 0.0
        %v474 = vadd.f32 %v472, %v473
        %475 = vst [vmem:[%s471] sm:$0xff] %v474
        %s476 = scalar_lea.vmem %s269, 24
        %v477 = vld [vmem:[%s476] sm:$0xff]
        %v478 = vsel %vm310, 1.0, 0.0
        %v479 = vadd.f32 %v477, %v478
        %480 = vst [vmem:[%s476] sm:$0xff] %v479
        %s481 = scalar_lea.vmem %s269, 32
        %v482 = vld [vmem:[%s481] sm:$0xff]
        %v483 = vsel %vm310, %v408, 0.0
        %v484 = vadd.f32 %v482, %v483
        %485 = vst [vmem:[%s481] sm:$0xff] %v484
        %s486 = scalar_lea.vmem %s269, 40
        %v487 = vld [vmem:[%s486] sm:$0xff]
        %v488 = vsel %vm310, %v451, 0.0
        %v489 = vadd.f32 %v487, %v488
        %490 = vst [vmem:[%s486] sm:$0xff] %v489
        %p491 = scmp.lt.s32.totalorder %s20, 0
        %s492 = scalar_select %p491, %s20, 0
        %p493 = scmp.lt.s32.totalorder %s21, 2
        %s494 = scalar_select %p493, %s21, 2
        %s495 = smul.addr %s494, 6
        %s496 = smul.addr %s492, 18
        %s497 = sadd.s32 %s495, %s496
        %s498 = smul.addr %s497, 8
        %s499 = scalar_lea.vmem %s3, %s498
        // Predicated region
        $region41: #{yolo_loss_pallas.1} parent=31 // pred_check
          %p500 = pneg %p135
        $region42: #{yolo_loss_pallas.1} parent=31 // pred_check_branch
          %502 = sbr.rel (%p500) target = $region44
        $region43: #{yolo_loss_pallas.1} parent=31 // pred_region
          _
        $region44: #{yolo_loss_pallas.1} parent=31 // pred_fallthru
          _
      $region32: #{yolo_loss_pallas.1} parent=5 // pred_fallthru
        _
      %p503 = scmp.le.s32.totalorder 2, %s10
      // Predicated region
      $region45: #{yolo_loss_pallas.1} parent=5 // pred_check
        %p504 = pneg %p503
      $region46: #{yolo_loss_pallas.1} parent=5 // pred_check_branch
        %506 = sbr.rel (%p504) target = $region48
      $region47: #{yolo_loss_pallas.1} parent=5 // pred_region
        %s507 = ssub.s32 %s10, 2
        // Predicated region
        $region49: #{yolo_loss_pallas.1} parent=47 // pred_check
          %p508 = pneg %p141
        $region50: #{yolo_loss_pallas.1} parent=47 // pred_check_branch
          %510 = sbr.rel (%p508) target = $region52
        $region51: #{yolo_loss_pallas.1} parent=47 // pred_region
          %p511 = scmp.lt.s32.totalorder %s23, 0
          %s512 = scalar_select %p511, %s23, 0
          %p513 = scmp.lt.s32.totalorder %s24, 2
          %s514 = scalar_select %p513, %s24, 2
          %s515 = smul.addr %s514, 6
          %s516 = smul.addr %s512, 18
          %s517 = sadd.s32 %s515, %s516
          %s518 = smul.addr %s517, 8
          %s519 = scalar_lea.vmem %s3, %s518
        $region52: #{yolo_loss_pallas.1} parent=47 // pred_fallthru
          _
      $region48: #{yolo_loss_pallas.1} parent=5 // pred_fallthru
        _
    $region6: #{yolo_loss_pallas.1} parent=1 // loop_footer
      %s14 = sadd.s32 1, %s10
    $region7: #{yolo_loss_pallas.1} parent=1 // loop_footer_branch
      %9 = sbr.rel target = $region3
    $region8: #{yolo_loss_pallas.1} parent=1 // loop_exit
      _
    %520 = vsyncpa [#allocation3], 1
    %s521 = scalar_lea.sflag [#allocation3], 1
    %522 = vsyncpa %s521, 1

</llo_original>
